<compile_context>
chip_gen: v7x
topology: tpu7x:2x2x1
jax: 0.10.0
libtpu: 0.0.40
codegen_flags: <defaults>
</compile_context>

<pallas_src>
import jax
import jax.numpy as jnp
from jax.experimental import pallas as pl
from jax.experimental.pallas import tpu as pltpu


# ----------------------------------------------------------------------------
# Fused kernel: conv (lane-dense bf16 matmul) + bias + ReLU + avg-pool + MLP
# ----------------------------------------------------------------------------
def fused_net_kernel(pT_ref, wT_ref, b_ref, pool_ref,
                     w1T_ref, b1_ref, w2T_ref, b2_ref, o_ref):
    # pT_ref:   (9*Cin, B*H*W)  bf16 im2col patches (lane dim = B*H*W)
    # wT_ref:   (Cout, 9*Cin)   bf16 conv weight, transposed
    # b_ref:    (Cout, 1)       f32 conv bias (broadcast over lanes)
    # pool_ref: (B*H*W, B)      f32 block-diagonal 1/(H*W) pooling matrix
    # w1T_ref:  (H1, Cout)      f32 Linear1 weight, transposed
    # b1_ref:   (H1, 1)         f32
    # w2T_ref:  (1, H1)         f32 Linear2 weight, transposed
    # b2_ref:   (1, 1)          f32
    # o_ref:    (1, B)          output (transposed; wrapper returns (B, 1))
    conv = jnp.dot(wT_ref[...], pT_ref[...],
                   preferred_element_type=jnp.float32)             # (Cout, BHW) MXU, f32 acc
    conv = jnp.maximum(conv + b_ref[...], 0.0)                     # bias + ReLU in f32 (VPU)
    feat = jnp.dot(conv, pool_ref[...],
                   preferred_element_type=jnp.float32)             # (Cout, B) global avg pool
    h = jnp.dot(w1T_ref[...], feat,
                preferred_element_type=jnp.float32) + b1_ref[...]  # (H1, B)
    h = jnp.maximum(h, 0.0)
    out = jnp.dot(w2T_ref[...], h,
                  preferred_element_type=jnp.float32) + b2_ref[...]  # (1, B)
    o_ref[...] = out.astype(o_ref.dtype)


# ----------------------------------------------------------------------------
# One-time hoisting of all parameter/shape-derived kernel operands
# ----------------------------------------------------------------------------
def prepare_kernel_params(params, input_shape):
    """Build kernel-ready constant operands once (not in the per-call path)."""
    B, Cin, H, W = input_shape
    Cout = params["w_conv"].shape[-1]
    H1 = params["w1"].shape[-1]
    HW, BHW = H * W, B * H * W

    wT = params["w_conv"].reshape(9 * Cin, Cout).astype(jnp.bfloat16).T  # (Cout, 9*Cin)
    bc = params["b_conv"].reshape(Cout, 1).astype(jnp.float32)
    # Block-diagonal mean-pool matrix: row i belongs to batch i // HW.
    pool = ((jnp.arange(BHW)[:, None] // HW == jnp.arange(B)[None, :])
            .astype(jnp.float32) / HW)                                   # (BHW, B)
    w1T = params["w1"].astype(jnp.float32).T                             # (H1, Cout)
    b1c = params["b1"].reshape(H1, 1).astype(jnp.float32)
    w2T = params["w2"].astype(jnp.float32).T                             # (1, H1)
    b2c = params["b2"].reshape(1, 1).astype(jnp.float32)
    return {"wT": wT, "bc": bc, "pool": pool,
            "w1T": w1T, "b1c": b1c, "w2T": w2T, "b2c": b2c}


# ----------------------------------------------------------------------------
# Jitted forward: im2col glue + single fused pallas_call
# ----------------------------------------------------------------------------
@jax.jit
def net_forward(x1_nchw, kp):
    """Equivalent of Net.forward: output = net(headnet(x1)). x1 is NCHW float32."""
    B, Cin, H, W = x1_nchw.shape
    BHW = B * H * W
    Cout = kp["wT"].shape[0]
    H1 = kp["w1T"].shape[0]

    # im2col built directly in the kernel's (9*Cin, B*H*W) lane-dense layout:
    # channel axis first, pad spatial dims, stack the 9 shifts on a leading axis.
    xc = jnp.transpose(x1_nchw, (1, 0, 2, 3))                      # (Cin, B, H, W)
    xp = jnp.pad(xc, ((0, 0), (0, 0), (1, 1), (1, 1)))             # (Cin, B, H+2, W+2)
    pT = jnp.stack(
        [xp[:, :, kh:kh + H, kw:kw + W] for kh in range(3) for kw in range(3)],
        axis=0,
    )                                                              # (9, Cin, B, H, W)
    pT = pT.reshape(9 * Cin, BHW).astype(jnp.bfloat16)             # (9*Cin, BHW)

    args = (pT, kp["wT"], kp["bc"], kp["pool"],
            kp["w1T"], kp["b1c"], kp["w2T"], kp["b2c"])

    flops = (2 * Cout * 9 * Cin * BHW        # conv matmul
             + 2 * Cout * BHW * B            # pooling matmul
             + 2 * H1 * Cout * B             # Linear1
             + 2 * H1 * B)                   # Linear2
    bytes_accessed = sum(int(a.size) * a.dtype.itemsize for a in args) + B * 4

    vmem_spec = pl.BlockSpec(memory_space=pltpu.MemorySpace.VMEM)
    outT = pl.pallas_call(
        fused_net_kernel,
        out_shape=jax.ShapeDtypeStruct((1, B), jnp.float32),
        in_specs=[vmem_spec] * len(args),
        out_specs=vmem_spec,
        cost_estimate=pl.CostEstimate(flops=flops, transcendentals=0,
                                      bytes_accessed=bytes_accessed),
    )(*args)
    return outT.T                                                  # (B, 1)


# ----------------------------------------------------------------------------
# Pure-JAX reference (for correctness check only)
# ----------------------------------------------------------------------------
def net_forward_ref(x_nchw, p):
    B, Cin, H, W = x_nchw.shape
    x = jnp.transpose(x_nchw, (0, 2, 3, 1))
    xp = jnp.pad(x, ((0, 0), (1, 1), (1, 1), (0, 0)))
    Cout = p["w_conv"].shape[-1]
    acc = jnp.zeros((B, H, W, Cout), jnp.float32)
    for kh in range(3):
        for kw in range(3):
            acc = acc + jnp.einsum("bhwc,co->bhwo",
                                   xp[:, kh:kh + H, kw:kw + W, :],
                                   p["w_conv"][kh, kw])
    acc = jax.nn.relu(acc + p["b_conv"])
    feat = acc.mean(axis=(1, 2))                                   # (B, Cout)
    h = jax.nn.relu(feat @ p["w1"] + p["b1"])
    return h @ p["w2"] + p["b2"]


# ----------------------------------------------------------------------------
# Deterministic parameter initialization (synthetic, PyTorch-default-like scale)
# ----------------------------------------------------------------------------
def init_params(key, cin=4, cout=8, hidden=32):
    ks = jax.random.split(key, 6)

    def u(k, shape, fan_in):
        bound = 1.0 / jnp.sqrt(fan_in)
        return jax.random.uniform(k, shape, jnp.float32, -bound, bound)

    return {
        "w_conv": u(ks[0], (3, 3, cin, cout), 9 * cin),   # (kh,kw,Cin,Cout)
        "b_conv": u(ks[1], (cout,), 9 * cin),
        "w1": u(ks[2], (cout, hidden), cout),
        "b1": u(ks[3], (hidden,), cout),
        "w2": u(ks[4], (hidden, 1), hidden),
        "b2": u(ks[5], (1,), hidden),
    }


if __name__ == "__main__":
    key = jax.random.PRNGKey(0)
    k_x, k_p = jax.random.split(key)

    # Small NCHW input consistent with the conv head: batch=2, channels=4, 16x16
    x1 = jax.random.normal(k_x, (2, 4, 16, 16), jnp.float32)
    params = init_params(k_p)

    # One-time hoisted, kernel-ready constants (pool matrix, transposed weights).
    kparams = jax.tree_util.tree_map(
        jax.block_until_ready, prepare_kernel_params(params, x1.shape))

    out = jax.block_until_ready(net_forward(x1, kparams))

    ref = net_forward_ref(x1, params)
    assert out.shape == (2, 1)
    # bf16 conv operands (f32 accumulation) -> slightly looser tolerance.
    assert jnp.allclose(out, ref, rtol=2e-3, atol=2e-3), (out, ref)

    print("KERNEL_OK")
</pallas_src>

<mosaic_0001>
module attributes {stable_mosaic.version = 11 : i64} {
  func.func @fused_net_kernel(%arg0: memref<36x512xbf16, #tpu.memory_space<vmem>>, %arg1: memref<8x36xbf16, #tpu.memory_space<vmem>>, %arg2: memref<8x1xf32, #tpu.memory_space<vmem>>, %arg3: memref<512x2xf32, #tpu.memory_space<vmem>>, %arg4: memref<32x8xf32, #tpu.memory_space<vmem>>, %arg5: memref<32x1xf32, #tpu.memory_space<vmem>>, %arg6: memref<1x32xf32, #tpu.memory_space<vmem>>, %arg7: memref<1x1xf32, #tpu.memory_space<vmem>>, %arg8: memref<1x2xf32, #tpu.memory_space<vmem>>) attributes {dimension_semantics = [], scalar_prefetch = 0 : i64, scratch_operands = 0 : i64, tpu.core_type = #tpu.core_type<tc>} {
    %c0 = arith.constant 0 : index
    %c0_0 = arith.constant 0 : index
    %0 = vector.load %arg1[%c0, %c0_0] : memref<8x36xbf16, #tpu.memory_space<vmem>>, vector<8x36xbf16>
    %c0_1 = arith.constant 0 : index
    %c0_2 = arith.constant 0 : index
    %1 = vector.load %arg0[%c0_1, %c0_2] : memref<36x512xbf16, #tpu.memory_space<vmem>>, vector<36x512xbf16>
    %cst = arith.constant dense<0.000000e+00> : vector<8x512xf32>
    %2 = tpu.matmul %0, %1, %cst {dimension_numbers = #tpu.dot_dimension_numbers<[1], [0], [0], [1], [0, 0, 1, 1], [], []>} : vector<8x36xbf16>, vector<36x512xbf16>, vector<8x512xf32> -> vector<8x512xf32>
    %c0_3 = arith.constant 0 : index
    %c0_4 = arith.constant 0 : index
    %3 = vector.load %arg2[%c0_3, %c0_4] : memref<8x1xf32, #tpu.memory_space<vmem>>, vector<8x1xf32>
    %4 = vector.broadcast %3 : vector<8x1xf32> to vector<8x512xf32>
    %5 = arith.addf %2, %4 : vector<8x512xf32>
    %cst_5 = arith.constant 0.000000e+00 : f32
    %6 = vector.broadcast %cst_5 : f32 to vector<8x512xf32>
    %7 = arith.maximumf %5, %6 : vector<8x512xf32>
    %c0_6 = arith.constant 0 : index
    %c0_7 = arith.constant 0 : index
    %8 = vector.load %arg3[%c0_6, %c0_7] : memref<512x2xf32, #tpu.memory_space<vmem>>, vector<512x2xf32>
    %cst_8 = arith.constant dense<0.000000e+00> : vector<8x2xf32>
    %9 = tpu.matmul %7, %8, %cst_8 {dimension_numbers = #tpu.dot_dimension_numbers<[1], [0], [0], [1], [0, 0, 1, 1], [], []>} : vector<8x512xf32>, vector<512x2xf32>, vector<8x2xf32> -> vector<8x2xf32>
    %c0_9 = arith.constant 0 : index
    %c0_10 = arith.constant 0 : index
    %10 = vector.load %arg4[%c0_9, %c0_10] : memref<32x8xf32, #tpu.memory_space<vmem>>, vector<32x8xf32>
    %cst_11 = arith.constant dense<0.000000e+00> : vector<32x2xf32>
    %11 = tpu.matmul %10, %9, %cst_11 {dimension_numbers = #tpu.dot_dimension_numbers<[1], [0], [0], [1], [0, 0, 1, 1], [], []>} : vector<32x8xf32>, vector<8x2xf32>, vector<32x2xf32> -> vector<32x2xf32>
    %c0_12 = arith.constant 0 : index
    %c0_13 = arith.constant 0 : index
    %12 = vector.load %arg5[%c0_12, %c0_13] : memref<32x1xf32, #tpu.memory_space<vmem>>, vector<32x1xf32>
    %13 = vector.broadcast %12 : vector<32x1xf32> to vector<32x2xf32>
    %14 = arith.addf %11, %13 : vector<32x2xf32>
    %cst_14 = arith.constant 0.000000e+00 : f32
    %15 = vector.broadcast %cst_14 : f32 to vector<32x2xf32>
    %16 = arith.maximumf %14, %15 : vector<32x2xf32>
    %c0_15 = arith.constant 0 : index
    %c0_16 = arith.constant 0 : index
    %17 = vector.load %arg6[%c0_15, %c0_16] : memref<1x32xf32, #tpu.memory_space<vmem>>, vector<1x32xf32>
    %cst_17 = arith.constant dense<0.000000e+00> : vector<1x2xf32>
    %18 = tpu.matmul %17, %16, %cst_17 {dimension_numbers = #tpu.dot_dimension_numbers<[1], [0], [0], [1], [0, 0, 1, 1], [], []>} : vector<1x32xf32>, vector<32x2xf32>, vector<1x2xf32> -> vector<1x2xf32>
    %c0_18 = arith.constant 0 : index
    %c0_19 = arith.constant 0 : index
    %19 = vector.load %arg7[%c0_18, %c0_19] : memref<1x1xf32, #tpu.memory_space<vmem>>, vector<1x1xf32>
    %20 = vector.broadcast %19 : vector<1x1xf32> to vector<1x2xf32>
    %21 = arith.addf %18, %20 : vector<1x2xf32>
    %c0_20 = arith.constant 0 : index
    %c0_21 = arith.constant 0 : index
    %22 = vector.load %arg8[%c0_20, %c0_21] : memref<1x2xf32, #tpu.memory_space<vmem>>, vector<1x2xf32>
    tpu.vector_store %arg8[%c0_20, %c0_21], %21 {strides = array<i32>} : memref<1x2xf32, #tpu.memory_space<vmem>>, vector<1x2xf32>,
    return
  }
}

</mosaic_0001>

<llo_original>
// kernel: net_forward.1
$region0: #{net_forward.1}
  #allocation0 [shape = 'u32[]', space=smem, size = 0x4, offset = 0x4, fixed_abs, tag = 'smem constant byte address 0x4 - core index']
  #allocation1 [shape = 'u32[144,128]{1,0:T(1,128)}', space=vmem, size = 0x12000, scoped, tag = 'internal scratch']
  #allocation2 [shape = 'f32[1,1]{1,0:T(1,128)S(1)}', space=vmem, size = 0x200, scoped, tag = 'scoped memory for net_forward.1']
  %s0 = inlined_call_operand.vmem [shape: bf16[36,512], index: 0, kind: input, shape index: {}]
  %s1 = inlined_call_operand.vmem [shape: bf16[8,36], index: 1, kind: input, shape index: {}]
  %s2 = inlined_call_operand.vmem [shape: f32[8,1], index: 2, kind: input, shape index: {}]
  %s3 = inlined_call_operand.vmem [shape: f32[512,2], index: 3, kind: input, shape index: {}]
  %s4 = inlined_call_operand.vmem [shape: f32[32,8], index: 4, kind: input, shape index: {}]
  %s5 = inlined_call_operand.vmem [shape: f32[32,1], index: 5, kind: input, shape index: {}]
  %s6 = inlined_call_operand.vmem [shape: f32[1,32], index: 6, kind: input, shape index: {}]
  %s7 = inlined_call_operand.<no memory space> [shape: f32[1,1], index: 7, kind: input, shape index: {}]
  %s8 = inlined_call_operand.hbm [shape: f32[1,2], index: 8, kind: output, shape index: {}]
  %s9 = sld [smem:[#allocation0]]
  $region42: #{net_forward.1} parent=0
    _
  %s11 = ssub.s32 1, %s9
  %s12 = scalar_select 0, %s11, %s9
  %v13 = vstv %s7
  %14 = vst [vmem:[#allocation2] sm:$0x1] %v13
  $region1: #{net_forward.1} parent=0
    #allocation3 [shape = 'u8[512]{0}', space=vmem, size = 0x400, scoped, tag = 'output window, operand 0, single buffered']
    #allocation4 [shape = 's32[1]{0}', space=sflag, size = 0x4, scoped, tag = 'scoped memory for net_forward.1']
    %15 = vsyncpa [#allocation4], 0
    // Predicated region
    $region2: #{net_forward.1} parent=1 // pred_check
      _
    $region3: #{net_forward.1} parent=1 // pred_check_branch
      %17 = sbr.rel (0) target = $region5
    $region4: #{net_forward.1} parent=1 // pred_region
      _
    $region5: #{net_forward.1} parent=1 // pred_fallthru
      _
    // Predicated region
    $region6: #{net_forward.1} parent=1 // pred_check
      _
    $region7: #{net_forward.1} parent=1 // pred_check_branch
      %19 = sbr.rel (0) target = $region9
    $region8: #{net_forward.1} parent=1 // pred_region
      _
    $region9: #{net_forward.1} parent=1 // pred_fallthru
      _
    // Predicated region
    $region10: #{net_forward.1} parent=1 // pred_check
      _
    $region11: #{net_forward.1} parent=1 // pred_check_branch
      %21 = sbr.rel (0) target = $region13
    $region12: #{net_forward.1} parent=1 // pred_region
      _
    $region13: #{net_forward.1} parent=1 // pred_fallthru
      _
    // Predicated region
    $region14: #{net_forward.1} parent=1 // pred_check
      _
    $region15: #{net_forward.1} parent=1 // pred_check_branch
      %23 = sbr.rel (0) target = $region17
    $region16: #{net_forward.1} parent=1 // pred_region
      _
    $region17: #{net_forward.1} parent=1 // pred_fallthru
      _
    // Predicated region
    $region18: #{net_forward.1} parent=1 // pred_check
      _
    $region19: #{net_forward.1} parent=1 // pred_check_branch
      %25 = sbr.rel (0) target = $region21
    $region20: #{net_forward.1} parent=1 // pred_region
      _
    $region21: #{net_forward.1} parent=1 // pred_fallthru
      _
    // Predicated region
    $region22: #{net_forward.1} parent=1 // pred_check
      _
    $region23: #{net_forward.1} parent=1 // pred_check_branch
      %27 = sbr.rel (0) target = $region25
    $region24: #{net_forward.1} parent=1 // pred_region
      _
    $region25: #{net_forward.1} parent=1 // pred_fallthru
      _
    // Predicated region
    $region26: #{net_forward.1} parent=1 // pred_check
      _
    $region27: #{net_forward.1} parent=1 // pred_check_branch
      %29 = sbr.rel (0) target = $region29
    $region28: #{net_forward.1} parent=1 // pred_region
      _
    $region29: #{net_forward.1} parent=1 // pred_fallthru
      _
    // Predicated region
    $region30: #{net_forward.1} parent=1 // pred_check
      _
    $region31: #{net_forward.1} parent=1 // pred_check_branch
      %31 = sbr.rel (0) target = $region33
    $region32: #{net_forward.1} parent=1 // pred_region
      _
    $region33: #{net_forward.1} parent=1 // pred_fallthru
      _
    %v33 = vld [vmem:[%s1] sm:$0xf]
    %v34 = vld [vmem:[%s0] sm:$0xff]
    %v35 = vld [vmem:[%s0 + $0x8] sm:$0xff]
    %v36 = vld [vmem:[%s0 + $0x10] sm:$0xff]
    %v37 = vld [vmem:[%s0 + $0x18] sm:$0xff]
    %v38 = vld [vmem:[%s0 + $0x20] sm:$0xff]
    %v39 = vld [vmem:[%s0 + $0x28] sm:$0xff]
    %v40 = vld [vmem:[%s0 + $0x30] sm:$0xff]
    %v41 = vld [vmem:[%s0 + $0x38] sm:$0xff]
    %v42 = vld [vmem:[%s0 + $0x40] sm:$0x33]
    %v43 = vld [vmem:[%s0 + $0x48] sm:$0x33]
    %v44 = vld [vmem:[%s2] sm:$0xff]
    %46 = vset.pattern.permute.xlu0 0
    %47 = vperm.xlu0 %46, %v44
    %v48 = vpop.permute.xlu0 %47
    %v60 = vunpack.c.l.b16 %v34
    %v61 = vunpack.c.h.b16 %v34
    %v62 = vunpack.c.l.b16 %v35
    %v63 = vunpack.c.h.b16 %v35
    %v64 = vunpack.c.l.b16 %v36
    %v65 = vunpack.c.h.b16 %v36
    %v66 = vunpack.c.l.b16 %v37
    %v67 = vunpack.c.h.b16 %v37
    %v68 = vunpack.c.l.b16 %v38
    %v69 = vunpack.c.h.b16 %v38
    %v70 = vunpack.c.l.b16 %v39
    %v71 = vunpack.c.h.b16 %v39
    %v72 = vunpack.c.l.b16 %v40
    %v73 = vunpack.c.h.b16 %v40
    %v74 = vunpack.c.l.b16 %v41
    %v75 = vunpack.c.h.b16 %v41
    %v76 = vunpack.c.l.b16 %v42
    %v77 = vunpack.c.h.b16 %v42
    %v78 = vunpack.c.l.b16 %v43
    %v79 = vunpack.c.h.b16 %v43
    %v80 = vpack.c.b16 %v64, %v60
    %v81 = vpack.c.b16 %v65, %v61
    %v82 = vpack.c.b16 %v66, %v62
    %v83 = vpack.c.b16 %v67, %v63
    %v84 = vpack.c.b16 %v72, %v68
    %v85 = vpack.c.b16 %v73, %v69
    %v86 = vpack.c.b16 %v74, %v70
    %v87 = vpack.c.b16 %v75, %v71
    %v88 = vpack.c.b16 %v76, %v76
    %v89 = vpack.c.b16 %v77, %v77
    %v90 = vpack.c.b16 %v78, %v78
    %v91 = vpack.c.b16 %v79, %v79
    %vm100 = vcmask 293888
    %v102 = vsel %vm100, %v33, 0
    %vm104 = vcmask 1041408
    %v106 = vsel %vm104, %v88, 0
    %v109 = vsel %vm104, %v89, 0
    %v112 = vsel %vm104, %v90, 0
    %v115 = vsel %vm104, %v91, 0
    %117 = vmatprep.subr.bf16.mxu0 %v81
    %118 = vmatpush1.bf16.msra.mxu0 %v80
    %119 = vmatprep.subr.bf16.mxu0 %v85
    %120 = vmatpush1.bf16.msra.mxu0 %v84
    %121 = vmatprep.subr.bf16.mxu0 %v109
    %122 = vmatpush1.bf16.msra.mxu0 %v106
    %123 = vmatprep.subr.bf16.mxu0 0
    %124 = vmatpush1.bf16.msra.mxu0 0
    %125 = vmatprep.subr.bf16.mxu0 0
    %126 = vmatpush1.bf16.msra.mxu0 0
    %127 = vmatprep.subr.bf16.mxu0 0
    %128 = vmatpush1.bf16.msra.mxu0 0
    %129 = vmatprep.subr.bf16.mxu0 0
    %130 = vmatpush1.bf16.msra.mxu0 0
    %131 = vmatprep.subr.bf16.mxu0 0
    %132 = vmatpush1.bf16.msra.mxu0 0
    %133 = vmatprep.subr.bf16.mxu0 0
    %134 = vmatpush1.bf16.msra.mxu0 0
    %135 = vmatprep.subr.bf16.mxu0 0
    %136 = vmatpush1.bf16.msra.mxu0 0
    %137 = vmatprep.subr.bf16.mxu0 0
    %138 = vmatpush1.bf16.msra.mxu0 0
    %139 = vmatprep.subr.bf16.mxu0 0
    %140 = vmatpush1.bf16.msra.mxu0 0
    %141 = vmatprep.subr.bf16.mxu0 0
    %142 = vmatpush1.bf16.msra.mxu0 0
    %143 = vmatprep.subr.bf16.mxu0 0
    %144 = vmatpush1.bf16.msra.mxu0 0
    %145 = vmatprep.subr.bf16.mxu0 0
    %146 = vmatpush1.bf16.msra.mxu0 0
    %147 = vmatprep.subr.bf16.mxu0 0
    %148 = vmatpush1.bf16.msra.mxu0 0
    %149 = vmatprep.mubr.bf16.mxu0 0
    %150 = vmatmul.mubr.bf16.gmra.mrb[0].mxu0 %v102
    %v151 = vpop.f32.mrb[0].mxu0
    %v152 = vadd.f32 %v48, %v151
    %v153 = vpop.f32.mrb[0].mxu0
    %v154 = vadd.f32 %v48, %v153
    %v155 = vpop.f32.mrb[0].mxu0
    %v156 = vpop.f32.mrb[0].mxu0
    %157 = vdwg.mxu0
    %158 = vmatprep.subr.bf16.mxu0 %v83
    %159 = vmatpush1.bf16.msra.mxu0 %v82
    %160 = vmatprep.subr.bf16.mxu0 %v87
    %161 = vmatpush1.bf16.msra.mxu0 %v86
    %162 = vmatprep.subr.bf16.mxu0 %v115
    %163 = vmatpush1.bf16.msra.mxu0 %v112
    %164 = vmatprep.subr.bf16.mxu0 0
    %165 = vmatpush1.bf16.msra.mxu0 0
    %166 = vmatprep.subr.bf16.mxu0 0
    %167 = vmatpush1.bf16.msra.mxu0 0
    %168 = vmatprep.subr.bf16.mxu0 0
    %169 = vmatpush1.bf16.msra.mxu0 0
    %170 = vmatprep.subr.bf16.mxu0 0
    %171 = vmatpush1.bf16.msra.mxu0 0
    %172 = vmatprep.subr.bf16.mxu0 0
    %173 = vmatpush1.bf16.msra.mxu0 0
    %174 = vmatprep.subr.bf16.mxu0 0
    %175 = vmatpush1.bf16.msra.mxu0 0
    %176 = vmatprep.subr.bf16.mxu0 0
    %177 = vmatpush1.bf16.msra.mxu0 0
    %178 = vmatprep.subr.bf16.mxu0 0
    %179 = vmatpush1.bf16.msra.mxu0 0
    %180 = vmatprep.subr.bf16.mxu0 0
    %181 = vmatpush1.bf16.msra.mxu0 0
    %182 = vmatprep.subr.bf16.mxu0 0
    %183 = vmatpush1.bf16.msra.mxu0 0
    %184 = vmatprep.subr.bf16.mxu0 0
    %185 = vmatpush1.bf16.msra.mxu0 0
    %186 = vmatprep.subr.bf16.mxu0 0
    %187 = vmatpush1.bf16.msra.mxu0 0
    %188 = vmatprep.subr.bf16.mxu0 0
    %189 = vmatpush1.bf16.msra.mxu0 0
    %190 = vmatprep.mubr.bf16.mxu0 0
    %191 = vmatmul.mubr.bf16.gmra.mrb[0].mxu0 %v102
    %v192 = vpop.f32.mrb[0].mxu0
    %v193 = vadd.f32 %v48, %v192
    %v194 = vpop.f32.mrb[0].mxu0
    %v195 = vadd.f32 %v48, %v194
    %v196 = vpop.f32.mrb[0].mxu0
    %v197 = vpop.f32.mrb[0].mxu0
    %198 = vdwg.mxu0
    %v199 = vmax.f32 %v152, 0.0
    %v200 = vmax.f32 %v154, 0.0
    %v201 = vmax.f32 %v193, 0.0
    %v202 = vmax.f32 %v195, 0.0
    %v203 = vld [vmem:[%s3] sm:$0xff]
    %v204 = vld [vmem:[%s3 + $0x8] sm:$0xff]
    %v205 = vld [vmem:[%s3 + $0x10] sm:$0xff]
    %v206 = vld [vmem:[%s3 + $0x18] sm:$0xff]
    %v207 = vld [vmem:[%s3 + $0x20] sm:$0xff]
    %v208 = vld [vmem:[%s3 + $0x28] sm:$0xff]
    %v209 = vld [vmem:[%s3 + $0x30] sm:$0xff]
    %v210 = vld [vmem:[%s3 + $0x38] sm:$0xff]
    %v211 = vld [vmem:[%s3 + $0x40] sm:$0xff]
    %v212 = vld [vmem:[%s3 + $0x48] sm:$0xff]
    %v213 = vld [vmem:[%s3 + $0x50] sm:$0xff]
    %v214 = vld [vmem:[%s3 + $0x58] sm:$0xff]
    %v215 = vld [vmem:[%s3 + $0x60] sm:$0xff]
    %v216 = vld [vmem:[%s3 + $0x68] sm:$0xff]
    %v217 = vld [vmem:[%s3 + $0x70] sm:$0xff]
    %v218 = vld [vmem:[%s3 + $0x78] sm:$0xff]
    %v219 = vld [vmem:[%s3 + $0x80] sm:$0xff]
    %v220 = vld [vmem:[%s3 + $0x88] sm:$0xff]
    %v221 = vld [vmem:[%s3 + $0x90] sm:$0xff]
    %v222 = vld [vmem:[%s3 + $0x98] sm:$0xff]
    %v223 = vld [vmem:[%s3 + $0xa0] sm:$0xff]
    %v224 = vld [vmem:[%s3 + $0xa8] sm:$0xff]
    %v225 = vld [vmem:[%s3 + $0xb0] sm:$0xff]
    %v226 = vld [vmem:[%s3 + $0xb8] sm:$0xff]
    %v227 = vld [vmem:[%s3 + $0xc0] sm:$0xff]
    %v228 = vld [vmem:[%s3 + $0xc8] sm:$0xff]
    %v229 = vld [vmem:[%s3 + $0xd0] sm:$0xff]
    %v230 = vld [vmem:[%s3 + $0xd8] sm:$0xff]
    %v231 = vld [vmem:[%s3 + $0xe0] sm:$0xff]
    %v232 = vld [vmem:[%s3 + $0xe8] sm:$0xff]
    %v233 = vld [vmem:[%s3 + $0xf0] sm:$0xff]
    %v234 = vld [vmem:[%s3 + $0xf8] sm:$0xff]
    %v235 = vld [vmem:[%s3 + $0x100] sm:$0xff]
    %v236 = vld [vmem:[%s3 + $0x108] sm:$0xff]
    %v237 = vld [vmem:[%s3 + $0x110] sm:$0xff]
    %v238 = vld [vmem:[%s3 + $0x118] sm:$0xff]
    %v239 = vld [vmem:[%s3 + $0x120] sm:$0xff]
    %v240 = vld [vmem:[%s3 + $0x128] sm:$0xff]
    %v241 = vld [vmem:[%s3 + $0x130] sm:$0xff]
    %v242 = vld [vmem:[%s3 + $0x138] sm:$0xff]
    %v243 = vld [vmem:[%s3 + $0x140] sm:$0xff]
    %v244 = vld [vmem:[%s3 + $0x148] sm:$0xff]
    %v245 = vld [vmem:[%s3 + $0x150] sm:$0xff]
    %v246 = vld [vmem:[%s3 + $0x158] sm:$0xff]
    %v247 = vld [vmem:[%s3 + $0x160] sm:$0xff]
    %v248 = vld [vmem:[%s3 + $0x168] sm:$0xff]
    %v249 = vld [vmem:[%s3 + $0x170] sm:$0xff]
    %v250 = vld [vmem:[%s3 + $0x178] sm:$0xff]
    %v251 = vld [vmem:[%s3 + $0x180] sm:$0xff]
    %v252 = vld [vmem:[%s3 + $0x188] sm:$0xff]
    %v253 = vld [vmem:[%s3 + $0x190] sm:$0xff]
    %v254 = vld [vmem:[%s3 + $0x198] sm:$0xff]
    %v255 = vld [vmem:[%s3 + $0x1a0] sm:$0xff]
    %v256 = vld [vmem:[%s3 + $0x1a8] sm:$0xff]
    %v257 = vld [vmem:[%s3 + $0x1b0] sm:$0xff]
    %v258 = vld [vmem:[%s3 + $0x1b8] sm:$0xff]
    %v259 = vld [vmem:[%s3 + $0x1c0] sm:$0xff]
    %v260 = vld [vmem:[%s3 + $0x1c8] sm:$0xff]
    %v261 = vld [vmem:[%s3 + $0x1d0] sm:$0xff]
    %v262 = vld [vmem:[%s3 + $0x1d8] sm:$0xff]
    %v263 = vld [vmem:[%s3 + $0x1e0] sm:$0xff]
    %v264 = vld [vmem:[%s3 + $0x1e8] sm:$0xff]
    %v265 = vld [vmem:[%s3 + $0x1f0] sm:$0xff]
    %v266 = vld [vmem:[%s3 + $0x1f8] sm:$0xff]
    %267 = vmatprep.subr.mxu0 0.0
    %268 = vmatpush1.msra.mxu0 %v203
    %269 = vmatprep.subr.mxu0 0.0
    %270 = vmatpush1.msra.mxu0 %v204
    %271 = vmatprep.subr.mxu0 0.0
    %272 = vmatpush1.msra.mxu0 %v205
    %273 = vmatprep.subr.mxu0 0.0
    %274 = vmatpush1.msra.mxu0 %v206
    %275 = vmatprep.subr.mxu0 0.0
    %276 = vmatpush1.msra.mxu0 %v207
    %277 = vmatprep.subr.mxu0 0.0
    %278 = vmatpush1.msra.mxu0 %v208
    %279 = vmatprep.subr.mxu0 0.0
    %280 = vmatpush1.msra.mxu0 %v209
    %281 = vmatprep.subr.mxu0 0.0
    %282 = vmatpush1.msra.mxu0 %v210
    %283 = vmatprep.subr.mxu0 0.0
    %284 = vmatpush1.msra.mxu0 %v211
    %285 = vmatprep.subr.mxu0 0.0
    %286 = vmatpush1.msra.mxu0 %v212
    %287 = vmatprep.subr.mxu0 0.0
    %288 = vmatpush1.msra.mxu0 %v213
    %289 = vmatprep.subr.mxu0 0.0
    %290 = vmatpush1.msra.mxu0 %v214
    %291 = vmatprep.subr.mxu0 0.0
    %292 = vmatpush1.msra.mxu0 %v215
    %293 = vmatprep.subr.mxu0 0.0
    %294 = vmatpush1.msra.mxu0 %v216
    %295 = vmatprep.subr.mxu0 0.0
    %296 = vmatpush1.msra.mxu0 %v217
    %297 = vmatprep.subr.mxu0 0.0
    %298 = vmatpush1.msra.mxu0 %v218
    %299 = vmatprep.subr.mxu0 0.0
    %300 = vmatpush1.msra.mxu0 %v219
    %301 = vmatprep.subr.mxu0 0.0
    %302 = vmatpush1.msra.mxu0 %v220
    %303 = vmatprep.subr.mxu0 0.0
    %304 = vmatpush1.msra.mxu0 %v221
    %305 = vmatprep.subr.mxu0 0.0
    %306 = vmatpush1.msra.mxu0 %v222
    %307 = vmatprep.subr.mxu0 0.0
    %308 = vmatpush1.msra.mxu0 %v223
    %309 = vmatprep.subr.mxu0 0.0
    %310 = vmatpush1.msra.mxu0 %v224
    %311 = vmatprep.subr.mxu0 0.0
    %312 = vmatpush1.msra.mxu0 %v225
    %313 = vmatprep.subr.mxu0 0.0
    %314 = vmatpush1.msra.mxu0 %v226
    %315 = vmatprep.subr.mxu0 0.0
    %316 = vmatpush1.msra.mxu0 %v227
    %317 = vmatprep.subr.mxu0 0.0
    %318 = vmatpush1.msra.mxu0 %v228
    %319 = vmatprep.subr.mxu0 0.0
    %320 = vmatpush1.msra.mxu0 %v229
    %321 = vmatprep.subr.mxu0 0.0
    %322 = vmatpush1.msra.mxu0 %v230
    %323 = vmatprep.subr.mxu0 0.0
    %324 = vmatpush1.msra.mxu0 %v231
    %325 = vmatprep.subr.mxu0 0.0
    %326 = vmatpush1.msra.mxu0 %v232
    %327 = vmatprep.subr.mxu0 0.0
    %328 = vmatpush1.msra.mxu0 %v233
    %329 = vmatprep.subr.mxu0 0.0
    %330 = vmatpush1.msra.mxu0 %v234
    %331 = vmatprep.mubr.f32.mxu0 %v200
    %332 = vmatmul.mubr.f32.gmra.mrb[0].mxu0 %v199
    %v333 = vpop.f32.mrb[0].mxu0
    %v334 = vadd.f32 0.0, %v333
    %v335 = vpop.f32.mrb[0].mxu0
    %336 = vdwg.mxu0
    %337 = vmatprep.subr.mxu0 0.0
    %338 = vmatpush1.msra.mxu0 %v235
    %339 = vmatprep.subr.mxu0 0.0
    %340 = vmatpush1.msra.mxu0 %v236
    %341 = vmatprep.subr.mxu0 0.0
    %342 = vmatpush1.msra.mxu0 %v237
    %343 = vmatprep.subr.mxu0 0.0
    %344 = vmatpush1.msra.mxu0 %v238
    %345 = vmatprep.subr.mxu0 0.0
    %346 = vmatpush1.msra.mxu0 %v239
    %347 = vmatprep.subr.mxu0 0.0
    %348 = vmatpush1.msra.mxu0 %v240
    %349 = vmatprep.subr.mxu0 0.0
    %350 = vmatpush1.msra.mxu0 %v241
    %351 = vmatprep.subr.mxu0 0.0
    %352 = vmatpush1.msra.mxu0 %v242
    %353 = vmatprep.subr.mxu0 0.0
    %354 = vmatpush1.msra.mxu0 %v243
    %355 = vmatprep.subr.mxu0 0.0
    %356 = vmatpush1.msra.mxu0 %v244
    %357 = vmatprep.subr.mxu0 0.0
    %358 = vmatpush1.msra.mxu0 %v245
    %359 = vmatprep.subr.mxu0 0.0
    %360 = vmatpush1.msra.mxu0 %v246
    %361 = vmatprep.subr.mxu0 0.0
    %362 = vmatpush1.msra.mxu0 %v247
    %363 = vmatprep.subr.mxu0 0.0
    %364 = vmatpush1.msra.mxu0 %v248
    %365 = vmatprep.subr.mxu0 0.0
    %366 = vmatpush1.msra.mxu0 %v249
    %367 = vmatprep.subr.mxu0 0.0
    %368 = vmatpush1.msra.mxu0 %v250
    %369 = vmatprep.subr.mxu0 0.0
    %370 = vmatpush1.msra.mxu0 %v251
    %371 = vmatprep.subr.mxu0 0.0
    %372 = vmatpush1.msra.mxu0 %v252
    %373 = vmatprep.subr.mxu0 0.0
    %374 = vmatpush1.msra.mxu0 %v253
    %375 = vmatprep.subr.mxu0 0.0
    %376 = vmatpush1.msra.mxu0 %v254
    %377 = vmatprep.subr.mxu0 0.0
    %378 = vmatpush1.msra.mxu0 %v255
    %379 = vmatprep.subr.mxu0 0.0
    %380 = vmatpush1.msra.mxu0 %v256
    %381 = vmatprep.subr.mxu0 0.0
    %382 = vmatpush1.msra.mxu0 %v257
    %383 = vmatprep.subr.mxu0 0.0
    %384 = vmatpush1.msra.mxu0 %v258
    %385 = vmatprep.subr.mxu0 0.0
    %386 = vmatpush1.msra.mxu0 %v259
    %387 = vmatprep.subr.mxu0 0.0
    %388 = vmatpush1.msra.mxu0 %v260
    %389 = vmatprep.subr.mxu0 0.0
    %390 = vmatpush1.msra.mxu0 %v261
    %391 = vmatprep.subr.mxu0 0.0
    %392 = vmatpush1.msra.mxu0 %v262
    %393 = vmatprep.subr.mxu0 0.0
    %394 = vmatpush1.msra.mxu0 %v263
    %395 = vmatprep.subr.mxu0 0.0
    %396 = vmatpush1.msra.mxu0 %v264
    %397 = vmatprep.subr.mxu0 0.0
    %398 = vmatpush1.msra.mxu0 %v265
    %399 = vmatprep.subr.mxu0 0.0
    %400 = vmatpush1.msra.mxu0 %v266
    %401 = vmatprep.mubr.f32.mxu0 %v202
    %402 = vmatmul.mubr.f32.gmra.mrb[0].mxu0 %v201
    %v403 = vpop.f32.mrb[0].mxu0
    %v404 = vadd.f32 %v334, %v403
    %v405 = vpop.f32.mrb[0].mxu0
    %406 = vdwg.mxu0
    %v407 = vld [vmem:[%s4] sm:$0xff]
    %v408 = vld [vmem:[%s4 + $0x8] sm:$0xff]
    %v409 = vld [vmem:[%s4 + $0x10] sm:$0xff]
    %v410 = vld [vmem:[%s4 + $0x18] sm:$0xff]
    %v411 = vld [vmem:[%s5] sm:$0xff]
    %v412 = vld [vmem:[%s5 + $0x8] sm:$0xff]
    %v413 = vld [vmem:[%s5 + $0x10] sm:$0xff]
    %v414 = vld [vmem:[%s5 + $0x18] sm:$0xff]
    %416 = vset.pattern.permute.xlu0 0
    %417 = vperm.xlu0 %416, %v411
    %v418 = vpop.permute.xlu0 %417
    %421 = vset.pattern.permute.xlu0 0
    %422 = vperm.xlu0 %421, %v412
    %v423 = vpop.permute.xlu0 %422
    %426 = vset.pattern.permute.xlu0 0
    %427 = vperm.xlu0 %426, %v413
    %v428 = vpop.permute.xlu0 %427
    %431 = vset.pattern.permute.xlu0 0
    %432 = vperm.xlu0 %431, %v414
    %v433 = vpop.permute.xlu0 %432
    %vm435 = vcmask 64512
    %v437 = vsel %vm435, %v407, 0
    %v440 = vsel %vm435, %v408, 0
    %v443 = vsel %vm435, %v409, 0
    %v446 = vsel %vm435, %v410, 0
    %448 = vmatprep.subr.mxu0 0.0
    %449 = vmatpush1.msra.mxu0 %v404
    %450 = vmatprep.subr.mxu0 0.0
    %451 = vmatpush1.msra.mxu0 0.0
    %452 = vmatprep.subr.mxu0 0.0
    %453 = vmatpush1.msra.mxu0 0.0
    %454 = vmatprep.subr.mxu0 0.0
    %455 = vmatpush1.msra.mxu0 0.0
    %456 = vmatprep.subr.mxu0 0.0
    %457 = vmatpush1.msra.mxu0 0.0
    %458 = vmatprep.subr.mxu0 0.0
    %459 = vmatpush1.msra.mxu0 0.0
    %460 = vmatprep.subr.mxu0 0.0
    %461 = vmatpush1.msra.mxu0 0.0
    %462 = vmatprep.subr.mxu0 0.0
    %463 = vmatpush1.msra.mxu0 0.0
    %464 = vmatprep.subr.mxu0 0.0
    %465 = vmatpush1.msra.mxu0 0.0
    %466 = vmatprep.subr.mxu0 0.0
    %467 = vmatpush1.msra.mxu0 0.0
    %468 = vmatprep.subr.mxu0 0.0
    %469 = vmatpush1.msra.mxu0 0.0
    %470 = vmatprep.subr.mxu0 0.0
    %471 = vmatpush1.msra.mxu0 0.0
    %472 = vmatprep.subr.mxu0 0.0
    %473 = vmatpush1.msra.mxu0 0.0
    %474 = vmatprep.subr.mxu0 0.0
    %475 = vmatpush1.msra.mxu0 0.0
    %476 = vmatprep.subr.mxu0 0.0
    %477 = vmatpush1.msra.mxu0 0.0
    %478 = vmatprep.subr.mxu0 0.0
    %479 = vmatpush1.msra.mxu0 0.0
    %480 = vmatprep.subr.mxu0 0.0
    %481 = vmatpush1.msra.mxu0 0.0
    %482 = vmatprep.subr.mxu0 0.0
    %483 = vmatpush1.msra.mxu0 0.0
    %484 = vmatprep.subr.mxu0 0.0
    %485 = vmatpush1.msra.mxu0 0.0
    %486 = vmatprep.subr.mxu0 0.0
    %487 = vmatpush1.msra.mxu0 0.0
    %488 = vmatprep.subr.mxu0 0.0
    %489 = vmatpush1.msra.mxu0 0.0
    %490 = vmatprep.subr.mxu0 0.0
    %491 = vmatpush1.msra.mxu0 0.0
    %492 = vmatprep.subr.mxu0 0.0
    %493 = vmatpush1.msra.mxu0 0.0
    %494 = vmatprep.subr.mxu0 0.0
    %495 = vmatpush1.msra.mxu0 0.0
    %496 = vmatprep.subr.mxu0 0.0
    %497 = vmatpush1.msra.mxu0 0.0
    %498 = vmatprep.subr.mxu0 0.0
    %499 = vmatpush1.msra.mxu0 0.0
    %500 = vmatprep.subr.mxu0 0.0
    %501 = vmatpush1.msra.mxu0 0.0
    %502 = vmatprep.subr.mxu0 0.0
    %503 = vmatpush1.msra.mxu0 0.0
    %504 = vmatprep.subr.mxu0 0.0
    %505 = vmatpush1.msra.mxu0 0.0
    %506 = vmatprep.subr.mxu0 0.0
    %507 = vmatpush1.msra.mxu0 0.0
    %508 = vmatprep.subr.mxu0 0.0
    %509 = vmatpush1.msra.mxu0 0.0
    %510 = vmatprep.subr.mxu0 0.0
    %511 = vmatpush1.msra.mxu0 0.0
    %512 = vmatprep.mubr.f32.mxu0 0.0
    %513 = vmatmul.mubr.f32.gmra.mrb[0].mxu0 %v437
    %v514 = vpop.f32.mrb[0].mxu0
    %v515 = vadd.f32 %v418, %v514
    %v516 = vpop.f32.mrb[0].mxu0
    %517 = vmatprep.mubr.f32.mxu0 0.0
    %518 = vmatmul.mubr.f32.gmra.mrb[0].mxu0 %v440
    %v519 = vpop.f32.mrb[0].mxu0
    %v520 = vadd.f32 %v423, %v519
    %v521 = vpop.f32.mrb[0].mxu0
    %522 = vmatprep.mubr.f32.mxu0 0.0
    %523 = vmatmul.mubr.f32.gmra.mrb[0].mxu0 %v443
    %v524 = vpop.f32.mrb[0].mxu0
    %v525 = vadd.f32 %v428, %v524
    %v526 = vpop.f32.mrb[0].mxu0
    %527 = vmatprep.mubr.f32.mxu0 0.0
    %528 = vmatmul.mubr.f32.gmra.mrb[0].mxu0 %v446
    %v529 = vpop.f32.mrb[0].mxu0
    %v530 = vadd.f32 %v433, %v529
    %v531 = vpop.f32.mrb[0].mxu0
    %532 = vdwg.mxu0
    %v533 = vmax.f32 %v515, 0.0
    %v534 = vmax.f32 %v520, 0.0
    %v535 = vmax.f32 %v525, 0.0
    %v536 = vmax.f32 %v530, 0.0
    %v537 = vld [vmem:[%s6] sm:$0x1]
    %v538 = vld [vmem:[#allocation2] sm:$0x1]
    %540 = vset.pattern.permute.xlu0 0
    %541 = vperm.xlu0 %540, %v538
    %v542 = vpop.permute.xlu0 %541
    %v544 = vlaneseq
    %v545 = vshrl.u32 %v544, 7
    %v546 = vsub.s32 0, %v545
    %v547 = vrot.slane %v542, %v546
    %vm548 = vcmask 261120
    %v550 = vsel %vm548, %v537, 0
    %552 = vmatprep.subr.mxu0 0.0
    %553 = vmatpush1.msra.mxu0 %v533
    %554 = vmatprep.subr.mxu0 0.0
    %555 = vmatpush1.msra.mxu0 %v534
    %556 = vmatprep.subr.mxu0 0.0
    %557 = vmatpush1.msra.mxu0 %v535
    %558 = vmatprep.subr.mxu0 0.0
    %559 = vmatpush1.msra.mxu0 %v536
    %560 = vmatprep.subr.mxu0 0.0
    %561 = vmatpush1.msra.mxu0 0.0
    %562 = vmatprep.subr.mxu0 0.0
    %563 = vmatpush1.msra.mxu0 0.0
    %564 = vmatprep.subr.mxu0 0.0
    %565 = vmatpush1.msra.mxu0 0.0
    %566 = vmatprep.subr.mxu0 0.0
    %567 = vmatpush1.msra.mxu0 0.0
    %568 = vmatprep.subr.mxu0 0.0
    %569 = vmatpush1.msra.mxu0 0.0
    %570 = vmatprep.subr.mxu0 0.0
    %571 = vmatpush1.msra.mxu0 0.0
    %572 = vmatprep.subr.mxu0 0.0
    %573 = vmatpush1.msra.mxu0 0.0
    %574 = vmatprep.subr.mxu0 0.0
    %575 = vmatpush1.msra.mxu0 0.0
    %576 = vmatprep.subr.mxu0 0.0
    %577 = vmatpush1.msra.mxu0 0.0
    %578 = vmatprep.subr.mxu0 0.0
    %579 = vmatpush1.msra.mxu0 0.0
    %580 = vmatprep.subr.mxu0 0.0
    %581 = vmatpush1.msra.mxu0 0.0
    %582 = vmatprep.subr.mxu0 0.0
    %583 = vmatpush1.msra.mxu0 0.0
    %584 = vmatprep.subr.mxu0 0.0
    %585 = vmatpush1.msra.mxu0 0.0
    %586 = vmatprep.subr.mxu0 0.0
    %587 = vmatpush1.msra.mxu0 0.0
    %588 = vmatprep.subr.mxu0 0.0
    %589 = vmatpush1.msra.mxu0 0.0
    %590 = vmatprep.subr.mxu0 0.0
    %591 = vmatpush1.msra.mxu0 0.0
    %592 = vmatprep.subr.mxu0 0.0
    %593 = vmatpush1.msra.mxu0 0.0
    %594 = vmatprep.subr.mxu0 0.0
    %595 = vmatpush1.msra.mxu0 0.0
    %596 = vmatprep.subr.mxu0 0.0
    %597 = vmatpush1.msra.mxu0 0.0
    %598 = vmatprep.subr.mxu0 0.0
    %599 = vmatpush1.msra.mxu0 0.0
    %600 = vmatprep.subr.mxu0 0.0
    %601 = vmatpush1.msra.mxu0 0.0
    %602 = vmatprep.subr.mxu0 0.0
    %603 = vmatpush1.msra.mxu0 0.0
    %604 = vmatprep.subr.mxu0 0.0
    %605 = vmatpush1.msra.mxu0 0.0
    %606 = vmatprep.subr.mxu0 0.0
    %607 = vmatpush1.msra.mxu0 0.0
    %608 = vmatprep.subr.mxu0 0.0
    %609 = vmatpush1.msra.mxu0 0.0
    %610 = vmatprep.subr.mxu0 0.0
    %611 = vmatpush1.msra.mxu0 0.0
    %612 = vmatprep.subr.mxu0 0.0
    %613 = vmatpush1.msra.mxu0 0.0
    %614 = vmatprep.subr.mxu0 0.0
    %615 = vmatpush1.msra.mxu0 0.0
    %616 = vmatprep.mubr.f32.mxu0 0.0
    %617 = vmatmul.mubr.f32.gmra.mrb[0].mxu0 %v550
    %v618 = vpop.f32.mrb[0].mxu0
    %v619 = vadd.f32 %v547, %v618
    %v620 = vpop.f32.mrb[0].mxu0
    %621 = vdwg.mxu0
    %vm622 = vcmask 8192
    %623 = vst.msk [vmem:[#allocation3] sm:$0x1] %vm622, %v619
    // Predicated region
    $region34: #{net_forward.1} parent=1 // pred_check
      _
    $region35: #{net_forward.1} parent=1 // pred_check_branch
      %625 = sbr.rel (0) target = $region37
    $region36: #{net_forward.1} parent=1 // pred_region
      %s627 = ssub.s32 16, 16
      %628 = vsyncadd [#allocation4], %s627
      %s630 = sshll.u32 [#allocation3], 4
      %s631 = int_to_ptr.vmem [resolvable:$true] %s630
      %633 = dma.vmem_to_hbm [thread:$0]  %s631, 16, %s8, [#allocation4]
    $region37: #{net_forward.1} parent=1 // pred_fallthru
      _
    // Predicated region
    $region38: #{net_forward.1} parent=1 // pred_check
      _
    $region39: #{net_forward.1} parent=1 // pred_check_branch
      %635 = sbr.rel (0) target = $region41
    $region40: #{net_forward.1} parent=1 // pred_region
      %636 = dma.done [#allocation4], 16
    $region41: #{net_forward.1} parent=1 // pred_fallthru
      _
    %637 = vsyncpa [#allocation4], 1

</llo_original>
